<compile_context>
chip_gen: v6e
topology: v6e:2x2x1
jax: 0.10.0
libtpu: 0.0.40
codegen_flags: <defaults>
</compile_context>

<pallas_src>
import jax
import jax.numpy as jnp
from jax.experimental import pallas as pl
from jax.experimental.pallas import tpu as pltpu

N_PACK = 8  # batch rows packed per lane-dense row: [B, 16] -> [B/8, 128]


def _round_up(n, m):
    return (n + m - 1) // m * m


def _probability_kernel(x_ref, w1_ref, b1_ref, w2_ref, b2_ref, o_ref):
    # x:  [tbp, 8*S=128]   (8 batch rows packed along lanes)
    # w1: [128, 8*H=256]   block-diagonal (8 copies of w1 on the diagonal)
    # b1: [1, 256]         (b1 tiled 8x)
    # w2: [256, 8]         column g holds w2 in rows g*H .. (g+1)*H
    # b2: [1, 1]
    # o:  [tbp, 8]         o[p, g] = probability for original batch row 8p+g
    x = x_ref[...]

    # Linear 1 (MXU) + bias + ReLU. Dropout(p=0.6) is identity at inference.
    h = jnp.dot(x, w1_ref[...], preferred_element_type=jnp.float32) + b1_ref[...]
    h = jnp.maximum(h, 0.0)

    # Linear 2 as an MXU matmul against the block matrix -> lane-dense-ish [tbp, 8].
    y = jnp.dot(h, w2_ref[...], preferred_element_type=jnp.float32) + b2_ref[...]

    # Exact sigmoid via a single EUP tanh (stays off the VALU slots, no approx error).
    o_ref[...] = (0.5 * jnp.tanh(0.5 * y) + 0.5).astype(o_ref.dtype)


def init_params(key, state_size, layer_size):
    """SEGAC weights_init_: xavier_uniform_ on weights, zeros on biases."""
    k1, k2 = jax.random.split(key)

    def xavier_uniform(k, fan_in, fan_out):
        limit = jnp.sqrt(6.0 / (fan_in + fan_out))
        return jax.random.uniform(k, (fan_in, fan_out), jnp.float32, -limit, limit)

    w1 = xavier_uniform(k1, state_size, layer_size)   # [S, H]
    b1 = jnp.zeros((layer_size,), jnp.float32)        # [H]
    w2 = xavier_uniform(k2, layer_size, 1)            # [H, 1]
    b2 = jnp.zeros((1,), jnp.float32)                 # [1]
    return w1, b1, w2, b2


def pack_params(w1, b1, w2, b2, n_pack=N_PACK):
    """Precompute lane-packed parameters (done once, outside the kernel)."""
    S, H = w1.shape
    eye = jnp.eye(n_pack, dtype=w1.dtype)
    w1p = jnp.kron(eye, w1)                               # [n_pack*S, n_pack*H] block-diag
    b1p = jnp.tile(b1.reshape(1, H), (1, n_pack))         # [1, n_pack*H]
    w2p = jnp.kron(eye, w2)                               # [n_pack*H, n_pack] block-columns
    b2p = b2.reshape(1, 1)                                # [1, 1]
    return w1p, b1p, w2p, b2p


def probability_forward(x, w1p, b1p, w2p, b2p, *, tile_b=16384):
    """x: [B, S] f32 -> [B, 1] f32 probabilities (inference forward of Probability)."""
    B, S = x.shape
    n_pack = N_PACK
    Kp = n_pack * S            # 128
    Hp = w1p.shape[1]          # n_pack * H
    assert w1p.shape[0] == Kp

    # Pad only a tiny remainder slab so B is a multiple of n_pack (no-op when B % 8 == 0,
    # which is the common case; this is the only copy path left in the wrapper).
    rem = B % n_pack
    if rem:
        x = jnp.concatenate([x, jnp.zeros((n_pack - rem, S), x.dtype)], axis=0)
    Bp = x.shape[0]
    bp = Bp // n_pack
    xp = x.reshape(bp, Kp)     # contiguous row-major reshape: free, no HBM copy

    # Tile selection: as large as possible (step-overhead bound kernel), but ensure
    # >= 2 grid steps for v7x megacore whenever there is enough work to split.
    tbp_cap = _round_up(max(tile_b // n_pack, 8), 8)
    tbp = min(tbp_cap, _round_up(bp, 8))
    if tbp >= bp and bp >= 16:
        tbp = _round_up(pl.cdiv(bp, 2), 8)
    grid = (pl.cdiv(bp, tbp),)   # ragged last block is masked by Pallas; no full jnp.pad

    out = pl.pallas_call(
        _probability_kernel,
        out_shape=jax.ShapeDtypeStruct((bp, n_pack), jnp.float32),
        grid=grid,
        in_specs=[
            pl.BlockSpec((tbp, Kp), lambda i: (i, 0)),   # batch-tiled packed activations
            pl.BlockSpec((Kp, Hp), lambda i: (0, 0)),    # VMEM-resident packed params
            pl.BlockSpec((1, Hp), lambda i: (0, 0)),
            pl.BlockSpec((Hp, n_pack), lambda i: (0, 0)),
            pl.BlockSpec((1, 1), lambda i: (0, 0)),
        ],
        out_specs=pl.BlockSpec((tbp, n_pack), lambda i: (i, 0)),
        compiler_params=pltpu.CompilerParams(
            dimension_semantics=("parallel",),
            # Headroom for large tiles; stays under v7x's 64 MiB physical VMEM.
            vmem_limit_bytes=48 * 1024 * 1024,
        ),
    )(xp, w1p, b1p, w2p, b2p)

    # [bp, 8] row-major flatten puts row p*8+g at index p*8+g -> original batch order.
    return out.reshape(Bp, 1)[:B]


def reference_forward(x, w1, b1, w2, b2):
    h = jnp.maximum(x @ w1 + b1, 0.0)
    return jax.nn.sigmoid(h @ w2 + b2)


def _check(out, ref):
    # Tolerance covers MXU default-precision f32 matmul vs. the XLA reference on real
    # hardware; interpret-mode / exact-f32 agreement is ~1e-6.
    err = float(jnp.max(jnp.abs(out - ref)))
    assert jnp.allclose(out, ref, atol=2e-3, rtol=2e-3), f"max abs err {err}"


if __name__ == "__main__":
    state_size = 16
    layer_size = 32

    key = jax.random.PRNGKey(0)
    kx, kp, kx2, kx3 = jax.random.split(key, 4)
    w1, b1, w2, b2 = init_params(kp, state_size, layer_size)
    w1p, b1p, w2p, b2p = pack_params(w1, b1, w2, b2)

    # Case 1: small batch, single grid step.
    batch = 8
    x = jax.random.normal(kx, (batch, state_size), jnp.float32)
    out = jax.block_until_ready(probability_forward(x, w1p, b1p, w2p, b2p))
    assert out.shape == (batch, 1)
    _check(out, reference_forward(x, w1, b1, w2, b2))

    # Case 2: batch not a multiple of the tile -> ragged, multi-step pipelined grid.
    batch2 = 200
    x2 = jax.random.normal(kx2, (batch2, state_size), jnp.float32)
    out2 = jax.block_until_ready(
        probability_forward(x2, w1p, b1p, w2p, b2p, tile_b=512)
    )
    assert out2.shape == (batch2, 1)
    _check(out2, reference_forward(x2, w1, b1, w2, b2))

    # Case 3: batch not a multiple of 8 -> tiny remainder-pad path.
    batch3 = 13
    x3 = jax.random.normal(kx3, (batch3, state_size), jnp.float32)
    out3 = jax.block_until_ready(probability_forward(x3, w1p, b1p, w2p, b2p))
    assert out3.shape == (batch3, 1)
    _check(out3, reference_forward(x3, w1, b1, w2, b2))

    print("KERNEL_OK")
</pallas_src>

<mosaic_0001>
module attributes {stable_mosaic.version = 11 : i64} {
  func.func @_probability_kernel(%arg0: i32, %arg1: memref<8x128xf32, #tpu.memory_space<vmem>>, %arg2: memref<128x256xf32, #tpu.memory_space<vmem>>, %arg3: memref<1x256xf32, #tpu.memory_space<vmem>>, %arg4: memref<256x8xf32, #tpu.memory_space<vmem>>, %arg5: memref<1x1xf32, #tpu.memory_space<vmem>>, %arg6: memref<8x8xf32, #tpu.memory_space<vmem>>) attributes {dimension_semantics = [#tpu.dimension_semantics<parallel>], iteration_bounds = array<i64: 1>, scalar_prefetch = 0 : i64, scratch_operands = 0 : i64, tpu.core_type = #tpu.core_type<tc>, window_params = [{transform_indices = @transform_0, window_bounds = array<i64: 8, 128>}, {pipeline_mode = #tpu.pipeline_mode<synchronous>, transform_indices = @transform_1, window_bounds = array<i64: 128, 256>}, {pipeline_mode = #tpu.pipeline_mode<synchronous>, transform_indices = @transform_2, window_bounds = array<i64: 1, 256>}, {pipeline_mode = #tpu.pipeline_mode<synchronous>, transform_indices = @transform_3, window_bounds = array<i64: 256, 8>}, {pipeline_mode = #tpu.pipeline_mode<synchronous>, transform_indices = @transform_4, window_bounds = array<i64: 1, 1>}, {transform_indices = @transform_5, window_bounds = array<i64: 8, 8>}]} {
    %c0 = arith.constant 0 : index
    %c0_0 = arith.constant 0 : index
    %0 = vector.load %arg1[%c0, %c0_0] : memref<8x128xf32, #tpu.memory_space<vmem>>, vector<8x128xf32>
    %c0_1 = arith.constant 0 : index
    %c0_2 = arith.constant 0 : index
    %1 = vector.load %arg2[%c0_1, %c0_2] : memref<128x256xf32, #tpu.memory_space<vmem>>, vector<128x256xf32>
    %cst = arith.constant dense<0.000000e+00> : vector<8x256xf32>
    %2 = tpu.matmul %0, %1, %cst {dimension_numbers = #tpu.dot_dimension_numbers<[1], [0], [0], [1], [0, 0, 1, 1], [], []>} : vector<8x128xf32>, vector<128x256xf32>, vector<8x256xf32> -> vector<8x256xf32>
    %c0_3 = arith.constant 0 : index
    %c0_4 = arith.constant 0 : index
    %3 = vector.load %arg3[%c0_3, %c0_4] : memref<1x256xf32, #tpu.memory_space<vmem>>, vector<1x256xf32>
    %4 = vector.broadcast %3 : vector<1x256xf32> to vector<8x256xf32>
    %5 = arith.addf %2, %4 : vector<8x256xf32>
    %cst_5 = arith.constant 0.000000e+00 : f32
    %6 = vector.broadcast %cst_5 : f32 to vector<8x256xf32>
    %7 = arith.maximumf %5, %6 : vector<8x256xf32>
    %c0_6 = arith.constant 0 : index
    %c0_7 = arith.constant 0 : index
    %8 = vector.load %arg4[%c0_6, %c0_7] : memref<256x8xf32, #tpu.memory_space<vmem>>, vector<256x8xf32>
    %cst_8 = arith.constant dense<0.000000e+00> : vector<8x8xf32>
    %9 = tpu.matmul %7, %8, %cst_8 {dimension_numbers = #tpu.dot_dimension_numbers<[1], [0], [0], [1], [0, 0, 1, 1], [], []>} : vector<8x256xf32>, vector<256x8xf32>, vector<8x8xf32> -> vector<8x8xf32>
    %c0_9 = arith.constant 0 : index
    %c0_10 = arith.constant 0 : index
    %10 = vector.load %arg5[%c0_9, %c0_10] : memref<1x1xf32, #tpu.memory_space<vmem>>, vector<1x1xf32>
    %11 = vector.broadcast %10 : vector<1x1xf32> to vector<8x8xf32>
    %12 = arith.addf %9, %11 : vector<8x8xf32>
    %cst_11 = arith.constant 5.000000e-01 : f32
    %13 = vector.broadcast %cst_11 : f32 to vector<8x8xf32>
    %14 = arith.mulf %13, %12 : vector<8x8xf32>
    %15 = math.tanh %14 : vector<8x8xf32>
    %cst_12 = arith.constant 5.000000e-01 : f32
    %16 = vector.broadcast %cst_12 : f32 to vector<8x8xf32>
    %17 = arith.mulf %16, %15 : vector<8x8xf32>
    %cst_13 = arith.constant 5.000000e-01 : f32
    %18 = vector.broadcast %cst_13 : f32 to vector<8x8xf32>
    %19 = arith.addf %17, %18 : vector<8x8xf32>
    %c0_14 = arith.constant 0 : index
    %c0_15 = arith.constant 0 : index
    %20 = vector.load %arg6[%c0_14, %c0_15] : memref<8x8xf32, #tpu.memory_space<vmem>>, vector<8x8xf32>
    tpu.vector_store %arg6[%c0_14, %c0_15], %19 {strides = array<i32>} : memref<8x8xf32, #tpu.memory_space<vmem>>, vector<8x8xf32>,
    return
  }
  func.func @transform_0(%arg0: i32) -> (i32, i32) {
    %c0_i32 = arith.constant 0 : i32
    %c0_i32_0 = arith.constant 0 : i32
    return %arg0, %c0_i32 : i32, i32
  }
  func.func @transform_1(%arg0: i32) -> (i32, i32) {
    %c0_i32 = arith.constant 0 : i32
    %c0_i32_0 = arith.constant 0 : i32
    %c0_i32_1 = arith.constant 0 : i32
    return %c0_i32, %c0_i32_0 : i32, i32
  }
  func.func @transform_2(%arg0: i32) -> (i32, i32) {
    %c0_i32 = arith.constant 0 : i32
    %c0_i32_0 = arith.constant 0 : i32
    %c0_i32_1 = arith.constant 0 : i32
    return %c0_i32, %c0_i32_0 : i32, i32
  }
  func.func @transform_3(%arg0: i32) -> (i32, i32) {
    %c0_i32 = arith.constant 0 : i32
    %c0_i32_0 = arith.constant 0 : i32
    %c0_i32_1 = arith.constant 0 : i32
    return %c0_i32, %c0_i32_0 : i32, i32
  }
  func.func @transform_4(%arg0: i32) -> (i32, i32) {
    %c0_i32 = arith.constant 0 : i32
    %c0_i32_0 = arith.constant 0 : i32
    %c0_i32_1 = arith.constant 0 : i32
    return %c0_i32, %c0_i32_0 : i32, i32
  }
  func.func @transform_5(%arg0: i32) -> (i32, i32) {
    %c0_i32 = arith.constant 0 : i32
    %c0_i32_0 = arith.constant 0 : i32
    return %arg0, %c0_i32 : i32, i32
  }
}

</mosaic_0001>

<llo_original>
// kernel: tpu_custom_call.1
$region0: #{tpu_custom_call.1}
  #allocation0 [shape = 'u32[]', space=smem, size = 0x4, offset = 0x4, fixed_abs, tag = 'smem constant byte address 0x4 - core index']
  #allocation1 [shape = 'u32[144,128]{1,0:T(1,128)}', space=vmem, size = 0x12000, scoped, tag = 'internal scratch']
  #allocation2 [shape = 'f32[1,1]{1,0:T(1,128)S(1)}', space=vmem, size = 0x200, scoped, tag = 'scoped memory for tpu_custom_call.1']
  %s0 = inlined_call_operand.vmem [shape: f32[1,128], index: 0, kind: input, shape index: {}]
  %s1 = inlined_call_operand.vmem [shape: f32[128,256], index: 1, kind: input, shape index: {}]
  %s2 = inlined_call_operand.vmem [shape: f32[1,256], index: 2, kind: input, shape index: {}]
  %s3 = inlined_call_operand.vmem [shape: f32[256,8], index: 3, kind: input, shape index: {}]
  %s4 = inlined_call_operand.<no memory space> [shape: f32[1,1], index: 4, kind: input, shape index: {}]
  %s5 = inlined_call_operand.hbm [shape: f32[1,8], index: 5, kind: output, shape index: {}]
  %s6 = sld [smem:[#allocation0]]
  $region30: #{tpu_custom_call.1} parent=0
    _
  %s8 = ssub.s32 1, %s6
  %s9 = scalar_select 0, %s8, %s6
  %v10 = vstv %s4
  %11 = vst [vmem:[#allocation2] sm:$0x1] %v10
  $region1: #{tpu_custom_call.1} parent=0
    #allocation3 [shape = 'u8[4096]{0}', space=vmem, size = 0x1000, scoped, tag = 'output window, operand 0, single buffered']
    #allocation4 [shape = 's32[1]{0}', space=sflag, size = 0x4, scoped, tag = 'scoped memory for tpu_custom_call.1']
    %12 = vsyncpa [#allocation4], 0
    // Predicated region
    $region2: #{tpu_custom_call.1} parent=1 // pred_check
      _
    $region3: #{tpu_custom_call.1} parent=1 // pred_check_branch
      %14 = sbr.rel (0) target = $region5
    $region4: #{tpu_custom_call.1} parent=1 // pred_region
      _
    $region5: #{tpu_custom_call.1} parent=1 // pred_fallthru
      _
    // Predicated region
    $region6: #{tpu_custom_call.1} parent=1 // pred_check
      _
    $region7: #{tpu_custom_call.1} parent=1 // pred_check_branch
      %16 = sbr.rel (0) target = $region9
    $region8: #{tpu_custom_call.1} parent=1 // pred_region
      _
    $region9: #{tpu_custom_call.1} parent=1 // pred_fallthru
      _
    // Predicated region
    $region10: #{tpu_custom_call.1} parent=1 // pred_check
      _
    $region11: #{tpu_custom_call.1} parent=1 // pred_check_branch
      %18 = sbr.rel (0) target = $region13
    $region12: #{tpu_custom_call.1} parent=1 // pred_region
      _
    $region13: #{tpu_custom_call.1} parent=1 // pred_fallthru
      _
    // Predicated region
    $region14: #{tpu_custom_call.1} parent=1 // pred_check
      _
    $region15: #{tpu_custom_call.1} parent=1 // pred_check_branch
      %20 = sbr.rel (0) target = $region17
    $region16: #{tpu_custom_call.1} parent=1 // pred_region
      _
    $region17: #{tpu_custom_call.1} parent=1 // pred_fallthru
      _
    // Predicated region
    $region18: #{tpu_custom_call.1} parent=1 // pred_check
      _
    $region19: #{tpu_custom_call.1} parent=1 // pred_check_branch
      %22 = sbr.rel (0) target = $region21
    $region20: #{tpu_custom_call.1} parent=1 // pred_region
      _
    $region21: #{tpu_custom_call.1} parent=1 // pred_fallthru
      _
    %v23 = vld [vmem:[%s0] sm:$0xff]
    %v24 = vld [vmem:[%s1] sm:$0xff]
    %v25 = vld [vmem:[%s1 + $0x8] sm:$0xff]
    %v26 = vld [vmem:[%s1 + $0x10] sm:$0xff]
    %v27 = vld [vmem:[%s1 + $0x18] sm:$0xff]
    %v28 = vld [vmem:[%s1 + $0x20] sm:$0xff]
    %v29 = vld [vmem:[%s1 + $0x28] sm:$0xff]
    %v30 = vld [vmem:[%s1 + $0x30] sm:$0xff]
    %v31 = vld [vmem:[%s1 + $0x38] sm:$0xff]
    %v32 = vld [vmem:[%s1 + $0x40] sm:$0xff]
    %v33 = vld [vmem:[%s1 + $0x48] sm:$0xff]
    %v34 = vld [vmem:[%s1 + $0x50] sm:$0xff]
    %v35 = vld [vmem:[%s1 + $0x58] sm:$0xff]
    %v36 = vld [vmem:[%s1 + $0x60] sm:$0xff]
    %v37 = vld [vmem:[%s1 + $0x68] sm:$0xff]
    %v38 = vld [vmem:[%s1 + $0x70] sm:$0xff]
    %v39 = vld [vmem:[%s1 + $0x78] sm:$0xff]
    %v40 = vld [vmem:[%s1 + $0x80] sm:$0xff]
    %v41 = vld [vmem:[%s1 + $0x88] sm:$0xff]
    %v42 = vld [vmem:[%s1 + $0x90] sm:$0xff]
    %v43 = vld [vmem:[%s1 + $0x98] sm:$0xff]
    %v44 = vld [vmem:[%s1 + $0xa0] sm:$0xff]
    %v45 = vld [vmem:[%s1 + $0xa8] sm:$0xff]
    %v46 = vld [vmem:[%s1 + $0xb0] sm:$0xff]
    %v47 = vld [vmem:[%s1 + $0xb8] sm:$0xff]
    %v48 = vld [vmem:[%s1 + $0xc0] sm:$0xff]
    %v49 = vld [vmem:[%s1 + $0xc8] sm:$0xff]
    %v50 = vld [vmem:[%s1 + $0xd0] sm:$0xff]
    %v51 = vld [vmem:[%s1 + $0xd8] sm:$0xff]
    %v52 = vld [vmem:[%s1 + $0xe0] sm:$0xff]
    %v53 = vld [vmem:[%s1 + $0xe8] sm:$0xff]
    %v54 = vld [vmem:[%s1 + $0xf0] sm:$0xff]
    %v55 = vld [vmem:[%s1 + $0xf8] sm:$0xff]
    %v56 = vld [vmem:[%s2] sm:$0x3]
    %v58 = vlaneseq
    %v59 = vshrl.u32 %v58, 7
    %v60 = vsub.s32 0, %v59
    %v61 = vrot.slane %v56, %v60
    %v62 = vlaneseq
    %v63 = vshrl.u32 %v62, 7
    %v64 = vsub.s32 1, %v63
    %v65 = vrot.slane %v56, %v64
    %68 = vmatprep.subr.mxu0 %v55
    %69 = vmatpush1.msra.mxu0 %v54
    %70 = vmatprep.subr.mxu0 %v53
    %71 = vmatpush1.msra.mxu0 %v52
    %72 = vmatprep.subr.mxu0 %v51
    %73 = vmatpush1.msra.mxu0 %v50
    %74 = vmatprep.subr.mxu0 %v49
    %75 = vmatpush1.msra.mxu0 %v48
    %76 = vmatprep.subr.mxu0 %v47
    %77 = vmatpush1.msra.mxu0 %v46
    %78 = vmatprep.subr.mxu0 %v45
    %79 = vmatpush1.msra.mxu0 %v44
    %80 = vmatprep.subr.mxu0 %v43
    %81 = vmatpush1.msra.mxu0 %v42
    %82 = vmatprep.subr.mxu0 %v41
    %83 = vmatpush1.msra.mxu0 %v40
    %84 = vmatprep.subr.mxu0 %v39
    %85 = vmatpush1.msra.mxu0 %v38
    %86 = vmatprep.subr.mxu0 %v37
    %87 = vmatpush1.msra.mxu0 %v36
    %88 = vmatprep.subr.mxu0 %v35
    %89 = vmatpush1.msra.mxu0 %v34
    %90 = vmatprep.subr.mxu0 %v33
    %91 = vmatpush1.msra.mxu0 %v32
    %92 = vmatprep.subr.mxu0 %v31
    %93 = vmatpush1.msra.mxu0 %v30
    %94 = vmatprep.subr.mxu0 %v29
    %95 = vmatpush1.msra.mxu0 %v28
    %96 = vmatprep.subr.mxu0 %v27
    %97 = vmatpush1.msra.mxu0 %v26
    %98 = vmatprep.subr.mxu0 %v25
    %99 = vmatpush1.msra.mxu0 %v24
    %100 = vmatprep.subr.mxu0 0.0
    %101 = vmatpush2.msra.mxu0 0.0
    %102 = vmatprep.subr.mxu0 0.0
    %103 = vmatpush2.msra.mxu0 0.0
    %104 = vmatprep.subr.mxu0 0.0
    %105 = vmatpush2.msra.mxu0 0.0
    %106 = vmatprep.subr.mxu0 0.0
    %107 = vmatpush2.msra.mxu0 0.0
    %108 = vmatprep.subr.mxu0 0.0
    %109 = vmatpush2.msra.mxu0 0.0
    %110 = vmatprep.subr.mxu0 0.0
    %111 = vmatpush2.msra.mxu0 0.0
    %112 = vmatprep.subr.mxu0 0.0
    %113 = vmatpush2.msra.mxu0 0.0
    %114 = vmatprep.subr.mxu0 0.0
    %115 = vmatpush2.msra.mxu0 0.0
    %116 = vmatprep.subr.mxu0 0.0
    %117 = vmatpush2.msra.mxu0 0.0
    %118 = vmatprep.subr.mxu0 0.0
    %119 = vmatpush2.msra.mxu0 0.0
    %120 = vmatprep.subr.mxu0 0.0
    %121 = vmatpush2.msra.mxu0 0.0
    %122 = vmatprep.subr.mxu0 0.0
    %123 = vmatpush2.msra.mxu0 0.0
    %124 = vmatprep.subr.mxu0 0.0
    %125 = vmatpush2.msra.mxu0 0.0
    %126 = vmatprep.subr.mxu0 0.0
    %127 = vmatpush2.msra.mxu0 0.0
    %128 = vmatprep.subr.mxu0 0.0
    %129 = vmatpush2.msra.mxu0 0.0
    %130 = vmatprep.subr.mxu0 0.0
    %131 = vmatpush2.msra.mxu0 0.0
    %132 = vmatprep.mubr.f32.mxu0 0.0
    %133 = vmatmul.mubr.f32.gmra.mxu0 %v23
    %v134 = vpop.f32.mrf.mxu0
    %v135 = vadd.f32 %v61, %v134
    %v136 = vpop.f32.mrf.mxu0
    %v137 = vadd.f32 %v65, %v136
    %138 = vdwg.mxu0
    %v139 = vmax.f32 %v135, 0.0
    %v140 = vmax.f32 %v137, 0.0
    %v141 = vld [vmem:[%s3] sm:$0xff]
    %v142 = vld [vmem:[%s3 + $0x8] sm:$0xff]
    %v143 = vld [vmem:[%s3 + $0x10] sm:$0xff]
    %v144 = vld [vmem:[%s3 + $0x18] sm:$0xff]
    %v145 = vld [vmem:[%s3 + $0x20] sm:$0xff]
    %v146 = vld [vmem:[%s3 + $0x28] sm:$0xff]
    %v147 = vld [vmem:[%s3 + $0x30] sm:$0xff]
    %v148 = vld [vmem:[%s3 + $0x38] sm:$0xff]
    %v149 = vld [vmem:[%s3 + $0x40] sm:$0xff]
    %v150 = vld [vmem:[%s3 + $0x48] sm:$0xff]
    %v151 = vld [vmem:[%s3 + $0x50] sm:$0xff]
    %v152 = vld [vmem:[%s3 + $0x58] sm:$0xff]
    %v153 = vld [vmem:[%s3 + $0x60] sm:$0xff]
    %v154 = vld [vmem:[%s3 + $0x68] sm:$0xff]
    %v155 = vld [vmem:[%s3 + $0x70] sm:$0xff]
    %v156 = vld [vmem:[%s3 + $0x78] sm:$0xff]
    %v157 = vld [vmem:[%s3 + $0x80] sm:$0xff]
    %v158 = vld [vmem:[%s3 + $0x88] sm:$0xff]
    %v159 = vld [vmem:[%s3 + $0x90] sm:$0xff]
    %v160 = vld [vmem:[%s3 + $0x98] sm:$0xff]
    %v161 = vld [vmem:[%s3 + $0xa0] sm:$0xff]
    %v162 = vld [vmem:[%s3 + $0xa8] sm:$0xff]
    %v163 = vld [vmem:[%s3 + $0xb0] sm:$0xff]
    %v164 = vld [vmem:[%s3 + $0xb8] sm:$0xff]
    %v165 = vld [vmem:[%s3 + $0xc0] sm:$0xff]
    %v166 = vld [vmem:[%s3 + $0xc8] sm:$0xff]
    %v167 = vld [vmem:[%s3 + $0xd0] sm:$0xff]
    %v168 = vld [vmem:[%s3 + $0xd8] sm:$0xff]
    %v169 = vld [vmem:[%s3 + $0xe0] sm:$0xff]
    %v170 = vld [vmem:[%s3 + $0xe8] sm:$0xff]
    %v171 = vld [vmem:[%s3 + $0xf0] sm:$0xff]
    %v172 = vld [vmem:[%s3 + $0xf8] sm:$0xff]
    %v173 = vld [vmem:[#allocation2] sm:$0x1]
    %v175 = vlaneseq
    %v176 = vshrl.u32 %v175, 7
    %v177 = vsub.s32 0, %v176
    %v178 = vrot.slane %v173, %v177
    %179 = vset.pattern.permute.xlu0 0
    %180 = vperm.xlu0 %179, %v178
    %v181 = vpop.permute.xlu0 %180
    %183 = vmatprep.subr.mxu0 0.0
    %184 = vmatpush1.msra.mxu0 %v156
    %185 = vmatprep.subr.mxu0 0.0
    %186 = vmatpush1.msra.mxu0 %v155
    %187 = vmatprep.subr.mxu0 0.0
    %188 = vmatpush1.msra.mxu0 %v154
    %189 = vmatprep.subr.mxu0 0.0
    %190 = vmatpush1.msra.mxu0 %v153
    %191 = vmatprep.subr.mxu0 0.0
    %192 = vmatpush1.msra.mxu0 %v152
    %193 = vmatprep.subr.mxu0 0.0
    %194 = vmatpush1.msra.mxu0 %v151
    %195 = vmatprep.subr.mxu0 0.0
    %196 = vmatpush1.msra.mxu0 %v150
    %197 = vmatprep.subr.mxu0 0.0
    %198 = vmatpush1.msra.mxu0 %v149
    %199 = vmatprep.subr.mxu0 0.0
    %200 = vmatpush1.msra.mxu0 %v148
    %201 = vmatprep.subr.mxu0 0.0
    %202 = vmatpush1.msra.mxu0 %v147
    %203 = vmatprep.subr.mxu0 0.0
    %204 = vmatpush1.msra.mxu0 %v146
    %205 = vmatprep.subr.mxu0 0.0
    %206 = vmatpush1.msra.mxu0 %v145
    %207 = vmatprep.subr.mxu0 0.0
    %208 = vmatpush1.msra.mxu0 %v144
    %209 = vmatprep.subr.mxu0 0.0
    %210 = vmatpush1.msra.mxu0 %v143
    %211 = vmatprep.subr.mxu0 0.0
    %212 = vmatpush1.msra.mxu0 %v142
    %213 = vmatprep.subr.mxu0 0.0
    %214 = vmatpush1.msra.mxu0 %v141
    %215 = vmatprep.subr.mxu0 0.0
    %216 = vmatpush2.msra.mxu0 %v172
    %217 = vmatprep.subr.mxu0 0.0
    %218 = vmatpush2.msra.mxu0 %v171
    %219 = vmatprep.subr.mxu0 0.0
    %220 = vmatpush2.msra.mxu0 %v170
    %221 = vmatprep.subr.mxu0 0.0
    %222 = vmatpush2.msra.mxu0 %v169
    %223 = vmatprep.subr.mxu0 0.0
    %224 = vmatpush2.msra.mxu0 %v168
    %225 = vmatprep.subr.mxu0 0.0
    %226 = vmatpush2.msra.mxu0 %v167
    %227 = vmatprep.subr.mxu0 0.0
    %228 = vmatpush2.msra.mxu0 %v166
    %229 = vmatprep.subr.mxu0 0.0
    %230 = vmatpush2.msra.mxu0 %v165
    %231 = vmatprep.subr.mxu0 0.0
    %232 = vmatpush2.msra.mxu0 %v164
    %233 = vmatprep.subr.mxu0 0.0
    %234 = vmatpush2.msra.mxu0 %v163
    %235 = vmatprep.subr.mxu0 0.0
    %236 = vmatpush2.msra.mxu0 %v162
    %237 = vmatprep.subr.mxu0 0.0
    %238 = vmatpush2.msra.mxu0 %v161
    %239 = vmatprep.subr.mxu0 0.0
    %240 = vmatpush2.msra.mxu0 %v160
    %241 = vmatprep.subr.mxu0 0.0
    %242 = vmatpush2.msra.mxu0 %v159
    %243 = vmatprep.subr.mxu0 0.0
    %244 = vmatpush2.msra.mxu0 %v158
    %245 = vmatprep.subr.mxu0 0.0
    %246 = vmatpush2.msra.mxu0 %v157
    %247 = vmatprep.mubr.f32.mxu0 %v140
    %248 = vmatmul.mubr.f32.gmra.mxu0 %v139
    %v249 = vpop.f32.mrf.mxu0
    %v250 = vadd.f32 %v181, %v249
    %v251 = vpop.f32.mrf.mxu0
    %252 = vdwg.mxu0
    %v253 = vmul.f32 %v250, 0.5
    %v254 = vtanh.pop %v253
    %v255 = vmul.f32 %v254, 0.5
    %v256 = vadd.f32 %v255, 0.5
    %vm257 = vcmask 64512
    %258 = vst.msk [vmem:[#allocation3] sm:$0xff] %vm257, %v256
    // Predicated region
    $region22: #{tpu_custom_call.1} parent=1 // pred_check
      _
    $region23: #{tpu_custom_call.1} parent=1 // pred_check_branch
      %260 = sbr.rel (0) target = $region25
    $region24: #{tpu_custom_call.1} parent=1 // pred_region
      %s262 = ssub.s32 128, 16
      %263 = vsyncadd [#allocation4], %s262
      %s264 = sshll.u32 [#allocation3], 4
      %s265 = int_to_ptr.vmem [resolvable:$true] %s264
      %270 = dma.vmem_to_hbm [thread:$0]  %s265, 16, %s5, [#allocation4], 16, 16, 1
    $region25: #{tpu_custom_call.1} parent=1 // pred_fallthru
      _
    // Predicated region
    $region26: #{tpu_custom_call.1} parent=1 // pred_check
      _
    $region27: #{tpu_custom_call.1} parent=1 // pred_check_branch
      %272 = sbr.rel (0) target = $region29
    $region28: #{tpu_custom_call.1} parent=1 // pred_region
      %273 = dma.done [#allocation4], 128
    $region29: #{tpu_custom_call.1} parent=1 // pred_fallthru
      _
    %274 = vsyncpa [#allocation4], 1

</llo_original>
